<compile_context>
chip_gen: v5e
topology: v5e:2x2
jax: 0.10.0
libtpu: 0.0.40
codegen_flags: <defaults>
</compile_context>

<pallas_src>
import math
import jax
import jax.numpy as jnp
from jax.experimental import pallas as pl
from jax.experimental.pallas import tpu as pltpu


# ---------------------------------------------------------------------------
# Kernel
# ---------------------------------------------------------------------------
def expert_kernel(x_ref, w1t_ref, w3t_ref, w2t_ref, o_ref, acc_ref):
    """One (token tile i, inter tile k) step of y = (silu(x@W1^T)*(x@W3^T))@W2^T.

    x_ref   : [tm, dim]   token tile (resident across the k axis)
    w1t_ref : [dim, ti]   gate projection slice (pre-transposed)
    w3t_ref : [dim, ti]   up   projection slice (pre-transposed)
    w2t_ref : [ti, dim]   down projection slice (pre-transposed)
    o_ref   : [tm, dim]   output tile (written on the last k step)
    acc_ref : [tm, dim]   f32 accumulator scratch
    """
    k = pl.program_id(1)
    x = x_ref[...]

    # Plain matmuls on the MXU, accumulating in f32.  Weights are already in
    # [dim, inter] layout so no transpose/relayout is materialized in-kernel.
    h1 = jnp.dot(x, w1t_ref[...], preferred_element_type=jnp.float32)
    h3 = jnp.dot(x, w3t_ref[...], preferred_element_type=jnp.float32)

    # SiLU(h1) * h3 in f32 (exp / divide hit the EUP slot, hidden under MXU).
    h = (h1 * jax.nn.sigmoid(h1)) * h3

    # Down-projection chunk: [tm, ti] @ [ti, dim].
    down = jnp.dot(h.astype(x.dtype), w2t_ref[...],
                   preferred_element_type=jnp.float32)

    # First reduction step writes directly (skips a full [tm,dim] f32
    # zero-init store + read-back); later steps accumulate.
    @pl.when(k == 0)
    def _first():
        acc_ref[...] = down

    @pl.when(k != 0)
    def _rest():
        acc_ref[...] += down

    @pl.when(k == pl.num_programs(1) - 1)
    def _finalize():
        o_ref[...] = acc_ref[...].astype(o_ref.dtype)


# ---------------------------------------------------------------------------
# Helpers
# ---------------------------------------------------------------------------
def _round_up(v, m):
    return ((v + m - 1) // m) * m


def _vmem_capacity_bytes():
    try:
        return int(pltpu.get_tpu_info().vmem_capacity_bytes)
    except Exception:
        return 64 << 20  # conservative fallback: v7x has 64 MiB per TensorCore


def prepare_expert_weights(w1, w2, w3, dtype=None):
    """One-time (weight-load time) preparation.

    PyTorch nn.Linear layout in, matmul-friendly layout out:
        w1, w3 : [inter, dim] -> [dim, inter]
        w2     : [dim, inter] -> [inter, dim]
    Do NOT call this per forward pass; the point is to hoist the transposes
    (and any dtype cast, e.g. to bf16 for the fast MXU path) out of the hot
    path.
    """
    if dtype is not None:
        w1, w2, w3 = (w.astype(dtype) for w in (w1, w2, w3))
    return w1.T, w3.T, w2.T  # w1t [dim,inter], w3t [dim,inter], w2t [inter,dim]


def _choose_tiles(N, dim, inter, in_itemsize, out_itemsize, vmem_cap, tm, ti):
    """VMEM-budget-aware (tm, ti) selection. Returns (tm, ti, footprint_bytes)."""
    budget = int(vmem_cap * 0.7)  # headroom for Mosaic internal scratch

    def footprint(tm_, ti_):
        return (2 * tm_ * dim * in_itemsize        # x tile, double-buffered
                + 2 * 3 * ti_ * dim * in_itemsize  # w1t/w3t/w2t slices, double-buffered
                + 2 * tm_ * dim * out_itemsize     # output tile, double-buffered
                + tm_ * dim * 4)                   # f32 accumulator

    if tm is None:
        # 128-MiB-VMEM parts (v5e/v6e) can afford a larger token tile, which
        # halves weight re-streaming from HBM; 64-MiB v7x keeps the smaller.
        tm_pref = 512 if vmem_cap >= (96 << 20) else 256
        if N <= tm_pref:
            tm = _round_up(N, 8)
            # Megacore / v7x: give the "parallel" token axis >= 2 tiles when
            # there is enough work for two TensorCores.
            if tm >= 256:
                tm = _round_up((tm + 1) // 2, 8)
        else:
            tm = tm_pref
    else:
        tm = max(8, _round_up(min(tm, _round_up(N, 8)), 8))

    if ti is None:
        ti = min(512, _round_up(inter, 128))
        while ti > 128 and footprint(tm, ti) > budget:
            ti -= 128
    else:
        ti = min(_round_up(ti, 128), _round_up(inter, 128))

    # If still over budget, shrink the token tile (keeps double-buffering).
    while footprint(tm, ti) > budget and tm > 128:
        tm = max(128, _round_up(tm // 2, 8))

    return tm, ti, footprint(tm, ti)


# ---------------------------------------------------------------------------
# Forward
# ---------------------------------------------------------------------------
def expert_forward(x, w1t, w3t, w2t, *, tm=None, ti=None):
    """x: [N, dim]; w1t, w3t: [dim, inter]; w2t: [inter, dim]  ->  [N, dim].

    Weights must already be in the prepared (pre-transposed) layout from
    `prepare_expert_weights`.  For production, store them in bf16 and pass a
    bf16 x so all three matmuls take the fast bf16 MXU path.
    """
    N, dim = x.shape
    inter = w1t.shape[1]
    assert w1t.shape == (dim, inter)
    assert w3t.shape == (dim, inter)
    assert w2t.shape == (inter, dim)

    # Keep weights and activations in the same dtype (mixed f32/bf16 would
    # silently hit the slow f32 MXU path).
    if w1t.dtype != x.dtype:
        w1t, w3t, w2t = (w.astype(x.dtype) for w in (w1t, w3t, w2t))

    in_itemsize = x.dtype.itemsize
    out_itemsize = x.dtype.itemsize
    vmem_cap = _vmem_capacity_bytes()
    tm, ti, fp = _choose_tiles(N, dim, inter, in_itemsize, out_itemsize,
                               vmem_cap, tm, ti)

    # Zero-pad token / inter axes up to tile multiples; exact for SwiGLU
    # (silu(0)*0 == 0, zero rows of W2^T contribute nothing).
    n_pad = _round_up(N, tm)
    i_pad = _round_up(inter, ti)
    if n_pad != N:
        x = jnp.pad(x, ((0, n_pad - N), (0, 0)))
    if i_pad != inter:
        # TODO(synk): hoist inter-padding into prepare_expert_weights for the
        # unaligned-inter production case; here it is per-call overhead.
        w1t = jnp.pad(w1t, ((0, 0), (0, i_pad - inter)))
        w3t = jnp.pad(w3t, ((0, 0), (0, i_pad - inter)))
        w2t = jnp.pad(w2t, ((0, i_pad - inter), (0, 0)))

    grid = (n_pad // tm, i_pad // ti)

    weight_bytes = (w1t.size + w3t.size + w2t.size) * in_itemsize
    cost = pl.CostEstimate(
        flops=6 * N * dim * inter,
        transcendentals=2 * N * inter,                 # exp + reciprocal of sigmoid
        bytes_accessed=(x.size * in_itemsize
                        + n_pad * dim * out_itemsize
                        + grid[0] * weight_bytes),     # weights re-streamed per token tile
    )

    vmem_limit = int(min(vmem_cap, max(fp + (4 << 20), 16 << 20)))

    out = pl.pallas_call(
        expert_kernel,
        out_shape=jax.ShapeDtypeStruct((n_pad, dim), x.dtype),
        grid_spec=pltpu.PrefetchScalarGridSpec(
            num_scalar_prefetch=0,
            grid=grid,
            in_specs=[
                pl.BlockSpec((tm, dim), lambda i, k: (i, 0)),   # x tile
                pl.BlockSpec((dim, ti), lambda i, k: (0, k)),   # w1^T slice
                pl.BlockSpec((dim, ti), lambda i, k: (0, k)),   # w3^T slice
                pl.BlockSpec((ti, dim), lambda i, k: (k, 0)),   # w2^T slice
            ],
            out_specs=pl.BlockSpec((tm, dim), lambda i, k: (i, 0)),
            scratch_shapes=[pltpu.VMEM((tm, dim), jnp.float32)],
        ),
        compiler_params=pltpu.CompilerParams(
            dimension_semantics=("parallel", "arbitrary"),
            vmem_limit_bytes=vmem_limit),
        cost_estimate=cost,
    )(x, w1t, w3t, w2t)

    return out[:N] if n_pad != N else out


# ---------------------------------------------------------------------------
# Reference / init
# ---------------------------------------------------------------------------
def xavier_normal(key, out_features, in_features, dtype=jnp.float32):
    # matches torch.nn.init.xavier_normal_ (gain=1)
    std = math.sqrt(2.0 / (in_features + out_features))
    return (jax.random.normal(key, (out_features, in_features)) * std).astype(dtype)


def expert_reference(x, w1, w3, w2):
    h1 = x @ w1.T
    h3 = x @ w3.T
    return (jax.nn.silu(h1) * h3) @ w2.T


if __name__ == "__main__":
    # Small shapes consistent with the module (tokens x dim -> inter hidden).
    N, dim, inter = 16, 64, 256

    key = jax.random.PRNGKey(0)
    kx, k1, k2, k3 = jax.random.split(key, 4)
    x = jax.random.normal(kx, (N, dim), dtype=jnp.float32)
    w1 = xavier_normal(k1, inter, dim)   # gate: dim -> inter
    w2 = xavier_normal(k2, dim, inter)   # down: inter -> dim
    w3 = xavier_normal(k3, inter, dim)   # up:   dim -> inter

    ref = expert_reference(x, w1, w3, w2)

    # 1) f32 path; ti=128 forces two reduction steps so the accumulator
    #    first-write / accumulate / finalize phases are all exercised.
    w1t, w3t, w2t = prepare_expert_weights(w1, w2, w3)
    out = jax.block_until_ready(expert_forward(x, w1t, w3t, w2t, ti=128))
    assert out.shape == (N, dim)
    assert jnp.allclose(out, ref, atol=1e-5, rtol=1e-5), "f32 mismatch vs reference"

    # 2) bf16 mixed-precision path (production config), looser tolerance.
    w1t_b, w3t_b, w2t_b = prepare_expert_weights(w1, w2, w3, dtype=jnp.bfloat16)
    out_b = jax.block_until_ready(
        expert_forward(x.astype(jnp.bfloat16), w1t_b, w3t_b, w2t_b, ti=128))
    assert jnp.allclose(out_b.astype(jnp.float32), ref, atol=5e-2, rtol=5e-2), \
        "bf16 mismatch vs reference"

    # 3) Unaligned shapes exercise the zero-padding path (N % 8 != 0,
    #    inter % ti != 0).
    N2, dim2, inter2 = 10, 64, 192
    kx2, k12, k22, k32 = jax.random.split(jax.random.PRNGKey(1), 4)
    x2 = jax.random.normal(kx2, (N2, dim2), dtype=jnp.float32)
    w1b = xavier_normal(k12, inter2, dim2)
    w2b = xavier_normal(k22, dim2, inter2)
    w3b = xavier_normal(k32, inter2, dim2)
    w1tb, w3tb, w2tb = prepare_expert_weights(w1b, w2b, w3b)
    out2 = jax.block_until_ready(expert_forward(x2, w1tb, w3tb, w2tb, ti=128))
    ref2 = expert_reference(x2, w1b, w3b, w2b)
    assert out2.shape == (N2, dim2)
    assert jnp.allclose(out2, ref2, atol=1e-5, rtol=1e-5), "unaligned mismatch"

    print("KERNEL_OK")
</pallas_src>

<mosaic_0001>
module attributes {stable_mosaic.version = 11 : i64} {
  func.func @expert_kernel(%arg0: i32, %arg1: i32, %arg2: memref<16x64xf32, #tpu.memory_space<vmem>>, %arg3: memref<64x128xf32, #tpu.memory_space<vmem>>, %arg4: memref<64x128xf32, #tpu.memory_space<vmem>>, %arg5: memref<128x64xf32, #tpu.memory_space<vmem>>, %arg6: memref<16x64xf32, #tpu.memory_space<vmem>>, %arg7: memref<16x64xf32, #tpu.memory_space<vmem>>) attributes {dimension_semantics = [#tpu.dimension_semantics<parallel>, #tpu.dimension_semantics<arbitrary>], iteration_bounds = array<i64: 1, 2>, scalar_prefetch = 0 : i64, scratch_operands = 1 : i64, tpu.core_type = #tpu.core_type<tc>, window_params = [{transform_indices = @transform_0, window_bounds = array<i64: 16, 64>}, {transform_indices = @transform_1, window_bounds = array<i64: 64, 128>}, {transform_indices = @transform_2, window_bounds = array<i64: 64, 128>}, {transform_indices = @transform_3, window_bounds = array<i64: 128, 64>}, {transform_indices = @transform_4, window_bounds = array<i64: 16, 64>}]} {
    %c0 = arith.constant 0 : index
    %c0_0 = arith.constant 0 : index
    %0 = vector.load %arg2[%c0, %c0_0] : memref<16x64xf32, #tpu.memory_space<vmem>>, vector<16x64xf32>
    %c0_1 = arith.constant 0 : index
    %c0_2 = arith.constant 0 : index
    %1 = vector.load %arg3[%c0_1, %c0_2] : memref<64x128xf32, #tpu.memory_space<vmem>>, vector<64x128xf32>
    %cst = arith.constant dense<0.000000e+00> : vector<16x128xf32>
    %2 = tpu.matmul %0, %1, %cst {dimension_numbers = #tpu.dot_dimension_numbers<[1], [0], [0], [1], [0, 0, 1, 1], [], []>} : vector<16x64xf32>, vector<64x128xf32>, vector<16x128xf32> -> vector<16x128xf32>
    %c0_3 = arith.constant 0 : index
    %c0_4 = arith.constant 0 : index
    %3 = vector.load %arg4[%c0_3, %c0_4] : memref<64x128xf32, #tpu.memory_space<vmem>>, vector<64x128xf32>
    %cst_5 = arith.constant dense<0.000000e+00> : vector<16x128xf32>
    %4 = tpu.matmul %0, %3, %cst_5 {dimension_numbers = #tpu.dot_dimension_numbers<[1], [0], [0], [1], [0, 0, 1, 1], [], []>} : vector<16x64xf32>, vector<64x128xf32>, vector<16x128xf32> -> vector<16x128xf32>
    %5 = arith.negf %2 : vector<16x128xf32>
    %6 = math.exp %5 : vector<16x128xf32>
    %cst_6 = arith.constant 1.000000e+00 : f32
    %7 = vector.broadcast %cst_6 : f32 to vector<16x128xf32>
    %8 = arith.addf %7, %6 : vector<16x128xf32>
    %9 = arith.divf %7, %8 : vector<16x128xf32>
    %10 = arith.mulf %2, %9 : vector<16x128xf32>
    %11 = arith.mulf %10, %4 : vector<16x128xf32>
    %c0_7 = arith.constant 0 : index
    %c0_8 = arith.constant 0 : index
    %12 = vector.load %arg5[%c0_7, %c0_8] : memref<128x64xf32, #tpu.memory_space<vmem>>, vector<128x64xf32>
    %cst_9 = arith.constant dense<0.000000e+00> : vector<16x64xf32>
    %13 = tpu.matmul %11, %12, %cst_9 {dimension_numbers = #tpu.dot_dimension_numbers<[1], [0], [0], [1], [0, 0, 1, 1], [], []>} : vector<16x128xf32>, vector<128x64xf32>, vector<16x64xf32> -> vector<16x64xf32>
    %c0_i32 = arith.constant 0 : i32
    %14 = arith.cmpi eq, %arg1, %c0_i32 : i32
    %15 = arith.extui %14 : i1 to i32
    %c0_i32_10 = arith.constant 0 : i32
    %16 = arith.cmpi ne, %15, %c0_i32_10 : i32
    scf.if %16 {
      %c0_14 = arith.constant 0 : index
      %c0_15 = arith.constant 0 : index
      %23 = vector.load %arg7[%c0_14, %c0_15] : memref<16x64xf32, #tpu.memory_space<vmem>>, vector<16x64xf32>
      tpu.vector_store %arg7[%c0_14, %c0_15], %13 {strides = array<i32>} : memref<16x64xf32, #tpu.memory_space<vmem>>, vector<16x64xf32>,
    } else {
    }
    %c0_i32_11 = arith.constant 0 : i32
    %17 = arith.cmpi ne, %arg1, %c0_i32_11 : i32
    %18 = arith.extui %17 : i1 to i32
    %c0_i32_12 = arith.constant 0 : i32
    %19 = arith.cmpi ne, %18, %c0_i32_12 : i32
    scf.if %19 {
      %c0_14 = arith.constant 0 : index
      %c0_15 = arith.constant 0 : index
      %23 = vector.load %arg7[%c0_14, %c0_15] : memref<16x64xf32, #tpu.memory_space<vmem>>, vector<16x64xf32>
      %24 = arith.addf %23, %13 : vector<16x64xf32>
      %c0_16 = arith.constant 0 : index
      %c0_17 = arith.constant 0 : index
      %25 = vector.load %arg7[%c0_16, %c0_17] : memref<16x64xf32, #tpu.memory_space<vmem>>, vector<16x64xf32>
      tpu.vector_store %arg7[%c0_16, %c0_17], %24 {strides = array<i32>} : memref<16x64xf32, #tpu.memory_space<vmem>>, vector<16x64xf32>,
    } else {
    }
    %c1_i32 = arith.constant 1 : i32
    %20 = arith.cmpi eq, %arg1, %c1_i32 : i32
    %21 = arith.extui %20 : i1 to i32
    %c0_i32_13 = arith.constant 0 : i32
    %22 = arith.cmpi ne, %21, %c0_i32_13 : i32
    scf.if %22 {
      %c0_14 = arith.constant 0 : index
      %c0_15 = arith.constant 0 : index
      %23 = vector.load %arg7[%c0_14, %c0_15] : memref<16x64xf32, #tpu.memory_space<vmem>>, vector<16x64xf32>
      %c0_16 = arith.constant 0 : index
      %c0_17 = arith.constant 0 : index
      %24 = vector.load %arg6[%c0_16, %c0_17] : memref<16x64xf32, #tpu.memory_space<vmem>>, vector<16x64xf32>
      tpu.vector_store %arg6[%c0_16, %c0_17], %23 {strides = array<i32>} : memref<16x64xf32, #tpu.memory_space<vmem>>, vector<16x64xf32>,
    } else {
    }
    return
  }
  func.func @transform_0(%arg0: i32, %arg1: i32) -> (i32, i32) {
    %c0_i32 = arith.constant 0 : i32
    %c0_i32_0 = arith.constant 0 : i32
    return %arg0, %c0_i32 : i32, i32
  }
  func.func @transform_1(%arg0: i32, %arg1: i32) -> (i32, i32) {
    %c0_i32 = arith.constant 0 : i32
    %c0_i32_0 = arith.constant 0 : i32
    return %c0_i32, %arg1 : i32, i32
  }
  func.func @transform_2(%arg0: i32, %arg1: i32) -> (i32, i32) {
    %c0_i32 = arith.constant 0 : i32
    %c0_i32_0 = arith.constant 0 : i32
    return %c0_i32, %arg1 : i32, i32
  }
  func.func @transform_3(%arg0: i32, %arg1: i32) -> (i32, i32) {
    %c0_i32 = arith.constant 0 : i32
    %c0_i32_0 = arith.constant 0 : i32
    return %arg1, %c0_i32 : i32, i32
  }
  func.func @transform_4(%arg0: i32, %arg1: i32) -> (i32, i32) {
    %c0_i32 = arith.constant 0 : i32
    %c0_i32_0 = arith.constant 0 : i32
    return %arg0, %c0_i32 : i32, i32
  }
}

</mosaic_0001>

<llo_original>
// kernel: tpu_custom_call.1
$region0: #{tpu_custom_call.1}
  #allocation0 [shape = 'u32[]', space=smem, size = 0x4, offset = 0x4, fixed_abs, tag = 'smem constant byte address 0x4 - core index']
  #allocation1 [shape = 'u32[72,128]{1,0:T(1,128)}', space=vmem, size = 0x9000, scoped, tag = 'internal scratch']
  #allocation2 [shape = 'f32[16,64]{1,0:T(8,128)}', space=vmem, size = 0x2000, scoped, tag = 'scratch operand']
  %s0 = inlined_call_operand.vmem [shape: f32[16,64], index: 0, kind: input, shape index: {}]
  %s1 = inlined_call_operand.vmem [shape: f32[64,256], index: 1, kind: input, shape index: {}]
  %s2 = inlined_call_operand.vmem [shape: f32[64,256], index: 2, kind: input, shape index: {}]
  %s3 = inlined_call_operand.vmem [shape: f32[256,64], index: 3, kind: input, shape index: {}]
  %s4 = inlined_call_operand.hbm [shape: f32[16,64], index: 4, kind: output, shape index: {}]
  %s5 = sld [smem:[#allocation0]]
  $region137: #{tpu_custom_call.1} parent=0
    _
  %s7 = ssub.s32 1, %s5
  %s8 = scalar_select 0, %s7, %s5
  $region1: #{tpu_custom_call.1} parent=0
    #allocation3 [shape = 'u8[65536]{0}', space=vmem, size = 0x10000, scoped, tag = 'input window, operand 1']
    #allocation4 [shape = 'u8[65536]{0}', space=vmem, size = 0x10000, scoped, tag = 'input window, operand 2']
    #allocation5 [shape = 'u8[8192]{0}', space=vmem, size = 0x2000, scoped, tag = 'output window, operand 0, single buffered']
    #allocation6 [shape = 's32[2]{0}', space=sflag, size = 0x8, scoped, tag = 'scoped memory for tpu_custom_call.1']
    %9 = vsyncpa [#allocation6], 0
    loop: start=0, step=1, limit=4
    $region2: #{tpu_custom_call.1} parent=1 // loop_pre_header
      _
    $region3: #{tpu_custom_call.1} parent=1 // loop_header
      %s11 = sphi 0, %s15
      %p12 = scmp.ge.s32.totalorder %s11, 4
      %s18 = sphi 0, %s30
      %s19 = sphi 0, %s26
      %s20 = sphi 0, %s18
      %s21 = sphi 0, %s19
      %s22 = sphi 0, %s20
      %s23 = sphi 0, %s21
      %s33 = sphi 0, %s35
      %s36 = sphi 0, %s33
      %s37 = sphi 0, %s36
      %s53 = sphi 0, %s37
      %s59 = sphi 0, %s61
      %s62 = sphi 0, %s59
      %s63 = sphi 0, %s62
      %s79 = sphi 0, %s63
      %s85 = sphi 0, %s87
      %s88 = sphi 0, %s85
      %s89 = sphi 0, %s88
      %s105 = sphi 0, %s89
      %s111 = sphi 0, %s113
      %s114 = sphi 0, %s111
      %s115 = sphi 0, %s114
      %s131 = sphi 0, %s115
      %s137 = sphi 0, %s139
      %s140 = sphi 0, %s137
      %s141 = sphi 0, %s140
      %s157 = sphi 0, %s141
    $region4: #{tpu_custom_call.1} parent=1 // loop_header_branch
      %14 = sbr.rel (%p12) target = $region8
    $region5: #{tpu_custom_call.1} parent=1 // loop_body
      %s16 = ssub.s32 %s11, 1
      %s17 = ssub.s32 %s11, 2
      %s24 = sadd.s32 1, %s19
      %p25 = scmp.ge.s32.totalorder %s24, 2
      %s26 = scalar_select %p25, 0, %s24
      %s27 = sadd.s32 1, %s18
      %s28 = scalar_select %p25, %s27, %s18
      %p29 = scmp.ge.s32.totalorder %s28, 1
      %s30 = scalar_select %p29, 0, %s28
      %s31 = ssub.s32 %s18, %s30
      %p32 = scmp.eq.s32.totalorder %s31, 0
      %s34 = sadd.s32 %s33, 1
      %s35 = scalar_select %p32, %s33, %s34
      %p38 = pneg %p32
      %p39 = scmp.eq.s32.totalorder %s11, 1
      %p40 = por %p38, %p39
      %p41 = scmp.ne.s32.totalorder %s33, %s36
      %p42 = scmp.eq.s32.totalorder %s11, 0
      %p43 = por %p41, %p42
      %p44 = scmp.ne.s32.totalorder %s33, %s36
      %p45 = scmp.eq.s32.totalorder %s16, 1
      %p46 = por %p44, %p45
      %p47 = scmp.ne.s32.totalorder %s36, %s37
      %p48 = scmp.eq.s32.totalorder %s16, 0
      %p49 = por %p47, %p48
      %p50 = scmp.ne.s32.totalorder %s36, %s37
      %p51 = scmp.eq.s32.totalorder %s17, 1
      %p52 = por %p50, %p51
      %p54 = scmp.ne.s32.totalorder %s37, %s53
      %p55 = scmp.eq.s32.totalorder %s17, 0
      %p56 = por %p54, %p55
      %s57 = ssub.s32 %s19, %s26
      %p58 = scmp.eq.s32.totalorder %s57, 0
      %s60 = sadd.s32 %s59, 1
      %s61 = scalar_select %p58, %s59, %s60
      %p64 = pneg %p58
      %p65 = scmp.eq.s32.totalorder %s11, 1
      %p66 = por %p64, %p65
      %p67 = scmp.ne.s32.totalorder %s59, %s62
      %p68 = scmp.eq.s32.totalorder %s11, 0
      %p69 = por %p67, %p68
      %p70 = scmp.ne.s32.totalorder %s59, %s62
      %p71 = scmp.eq.s32.totalorder %s16, 1
      %p72 = por %p70, %p71
      %p73 = scmp.ne.s32.totalorder %s62, %s63
      %p74 = scmp.eq.s32.totalorder %s16, 0
      %p75 = por %p73, %p74
      %p76 = scmp.ne.s32.totalorder %s62, %s63
      %p77 = scmp.eq.s32.totalorder %s17, 1
      %p78 = por %p76, %p77
      %p80 = scmp.ne.s32.totalorder %s63, %s79
      %p81 = scmp.eq.s32.totalorder %s17, 0
      %p82 = por %p80, %p81
      %s83 = ssub.s32 %s19, %s26
      %p84 = scmp.eq.s32.totalorder %s83, 0
      %s86 = sadd.s32 %s85, 1
      %s87 = scalar_select %p84, %s85, %s86
      %p90 = pneg %p84
      %p91 = scmp.eq.s32.totalorder %s11, 1
      %p92 = por %p90, %p91
      %p93 = scmp.ne.s32.totalorder %s85, %s88
      %p94 = scmp.eq.s32.totalorder %s11, 0
      %p95 = por %p93, %p94
      %p96 = scmp.ne.s32.totalorder %s85, %s88
      %p97 = scmp.eq.s32.totalorder %s16, 1
      %p98 = por %p96, %p97
      %p99 = scmp.ne.s32.totalorder %s88, %s89
      %p100 = scmp.eq.s32.totalorder %s16, 0
      %p101 = por %p99, %p100
      %p102 = scmp.ne.s32.totalorder %s88, %s89
      %p103 = scmp.eq.s32.totalorder %s17, 1
      %p104 = por %p102, %p103
      %p106 = scmp.ne.s32.totalorder %s89, %s105
      %p107 = scmp.eq.s32.totalorder %s17, 0
      %p108 = por %p106, %p107
      %s109 = ssub.s32 %s19, %s26
      %p110 = scmp.eq.s32.totalorder %s109, 0
      %s112 = sadd.s32 %s111, 1
      %s113 = scalar_select %p110, %s111, %s112
      %p116 = pneg %p110
      %p117 = scmp.eq.s32.totalorder %s11, 1
      %p118 = por %p116, %p117
      %p119 = scmp.ne.s32.totalorder %s111, %s114
      %p120 = scmp.eq.s32.totalorder %s11, 0
      %p121 = por %p119, %p120
      %p122 = scmp.ne.s32.totalorder %s111, %s114
      %p123 = scmp.eq.s32.totalorder %s16, 1
      %p124 = por %p122, %p123
      %p125 = scmp.ne.s32.totalorder %s114, %s115
      %p126 = scmp.eq.s32.totalorder %s16, 0
      %p127 = por %p125, %p126
      %p128 = scmp.ne.s32.totalorder %s114, %s115
      %p129 = scmp.eq.s32.totalorder %s17, 1
      %p130 = por %p128, %p129
      %p132 = scmp.ne.s32.totalorder %s115, %s131
      %p133 = scmp.eq.s32.totalorder %s17, 0
      %p134 = por %p132, %p133
      %s135 = ssub.s32 %s18, %s30
      %p136 = scmp.eq.s32.totalorder %s135, 0
      %s138 = sadd.s32 %s137, 1
      %s139 = scalar_select %p136, %s137, %s138
      %p142 = pneg %p136
      %p143 = scmp.eq.s32.totalorder %s11, 1
      %p144 = por %p142, %p143
      %p145 = scmp.ne.s32.totalorder %s137, %s140
      %p146 = scmp.eq.s32.totalorder %s11, 0
      %p147 = por %p145, %p146
      %p148 = scmp.ne.s32.totalorder %s137, %s140
      %p149 = scmp.eq.s32.totalorder %s16, 1
      %p150 = por %p148, %p149
      %p151 = scmp.ne.s32.totalorder %s140, %s141
      %p152 = scmp.eq.s32.totalorder %s16, 0
      %p153 = por %p151, %p152
      %p154 = scmp.ne.s32.totalorder %s140, %s141
      %p155 = scmp.eq.s32.totalorder %s17, 1
      %p156 = por %p154, %p155
      %p158 = scmp.ne.s32.totalorder %s141, %s157
      %p159 = scmp.eq.s32.totalorder %s17, 0
      %p160 = por %p158, %p159
      %p161 = scmp.le.s32.totalorder 1, %s11
      %p162 = scmp.lt.s32.totalorder %s11, 3
      %p163 = pnand %p161, %p162
      %p164 = pneg %p163
      // Predicated region
      $region9: #{tpu_custom_call.1} parent=5 // pred_check
        _
      $region10: #{tpu_custom_call.1} parent=5 // pred_check_branch
        %166 = sbr.rel (%p163) target = $region12
      $region11: #{tpu_custom_call.1} parent=5 // pred_region
        %s167 = ssub.s32 %s11, 1
        // Predicated region
        $region13: #{tpu_custom_call.1} parent=11 // pred_check
          %p168 = pneg %p49
        $region14: #{tpu_custom_call.1} parent=11 // pred_check_branch
          %170 = sbr.rel (%p168) target = $region16
        $region15: #{tpu_custom_call.1} parent=11 // pred_region
          %s171 = smul.u32 2, %s20
          %p172 = scmp.lt.s32.totalorder %s171, 1
          %s173 = scalar_select %p172, %s171, 1
          %s174 = smul.addr %s173, 8
          %s175 = scalar_lea.vmem %s0, %s174
          %s176 = smul.u32 2, %s20
        $region16: #{tpu_custom_call.1} parent=11 // pred_fallthru
          _
      $region12: #{tpu_custom_call.1} parent=5 // pred_fallthru
        _
      %p177 = scmp.lt.s32.totalorder %s11, 2
      // Predicated region
      $region17: #{tpu_custom_call.1} parent=5 // pred_check
        %p178 = pneg %p177
      $region18: #{tpu_custom_call.1} parent=5 // pred_check_branch
        %180 = sbr.rel (%p178) target = $region20
      $region19: #{tpu_custom_call.1} parent=5 // pred_region
        // Predicated region
        $region21: #{tpu_custom_call.1} parent=19 // pred_check
          %p181 = pneg %p69
        $region22: #{tpu_custom_call.1} parent=19 // pred_check_branch
          %183 = sbr.rel (%p181) target = $region24
        $region23: #{tpu_custom_call.1} parent=19 // pred_region
          %s184 = sand.u32 %s59, 1
          %s185 = sand.u32 %s59, 1
          %s186 = smul.addr %s185, 64
          %s187 = scalar_lea.vmem [#allocation3], %s186
          %s188 = smul.addr %s19, 8
          %s189 = scalar_lea.vmem %s1, %s188
          // Predicated region
          $region25: #{tpu_custom_call.1} parent=23 // pred_check
            _
          $region26: #{tpu_custom_call.1} parent=23 // pred_check_branch
            %191 = sbr.rel (0) target = $region28
          $region27: #{tpu_custom_call.1} parent=23 // pred_region
            // Predicated region
            $region29: #{tpu_custom_call.1} parent=27 // pred_check
              _
            $region30: #{tpu_custom_call.1} parent=27 // pred_check_branch
              %193 = sbr.rel (0) target = $region32
            $region31: #{tpu_custom_call.1} parent=27 // pred_region
              // Predicated region
              $region44: #{tpu_custom_call.1} parent=31 // pred_check
                _
              $region45: #{tpu_custom_call.1} parent=31 // pred_check_branch
                %223 = sbr.rel (0) target = $region47
              $region46: #{tpu_custom_call.1} parent=31 // pred_region
                loop: start=0, step=1, limit=1
                $region48: #{tpu_custom_call.1} parent=46 // loop_pre_header
                  _
                $region49: #{tpu_custom_call.1} parent=46 // loop_header
                  %s225 = sphi 0, %s229
                  %p226 = scmp.ge.s32.totalorder %s225, 1
                  %s230 = sphi %s189, %s189
                  %s231 = sphi %s187, %s187
                $region50: #{tpu_custom_call.1} parent=46 // loop_header_branch
                  %228 = sbr.rel (%p226) target = $region54
                $region51: #{tpu_custom_call.1} parent=46 // loop_body
                  %v232 = vld [vmem:[%s230] sm:$0xff]
                  %233 = vst [vmem:[%s231] sm:$0xff] %v232
                  %v234 = vld [vmem:[%s230 + $0x10] sm:$0xff]
                  %235 = vst [vmem:[%s231 + $0x8] sm:$0xff] %v234
                  %v236 = vld [vmem:[%s230 + $0x20] sm:$0xff]
                  %237 = vst [vmem:[%s231 + $0x10] sm:$0xff] %v236
                  %v238 = vld [vmem:[%s230 + $0x30] sm:$0xff]
                  %239 = vst [vmem:[%s231 + $0x18] sm:$0xff] %v238
                  %v240 = vld [vmem:[%s230 + $0x40] sm:$0xff]
                  %241 = vst [vmem:[%s231 + $0x20] sm:$0xff] %v240
                  %v242 = vld [vmem:[%s230 + $0x50] sm:$0xff]
                  %243 = vst [vmem:[%s231 + $0x28] sm:$0xff] %v242
                  %v244 = vld [vmem:[%s230 + $0x60] sm:$0xff]
                  %245 = vst [vmem:[%s231 + $0x30] sm:$0xff] %v244
                  %v246 = vld [vmem:[%s230 + $0x70] sm:$0xff]
                  %247 = vst [vmem:[%s231 + $0x38] sm:$0xff] %v246
                $region52: #{tpu_custom_call.1} parent=46 // loop_footer
                  %s229 = sadd.s32 1, %s225
                $region53: #{tpu_custom_call.1} parent=46 // loop_footer_branch
                  %224 = sbr.rel target = $region49
                $region54: #{tpu_custom_call.1} parent=46 // loop_exit
                  _
              $region47: #{tpu_custom_call.1} parent=31 // pred_fallthru
                _
              // Predicated region
              $region55: #{tpu_custom_call.1} parent=31 // pred_check
                _
              $region56: #{tpu_custom_call.1} parent=31 // pred_check_branch
                %249 = sbr.rel target = $region58
              $region57: #{tpu_custom_call.1} parent=31 // pred_region
                _
              $region58: #{tpu_custom_call.1} parent=31 // pred_fallthru
                _
            $region32: #{tpu_custom_call.1} parent=27 // pred_fallthru
              _
            // Predicated region
            $region33: #{tpu_custom_call.1} parent=27 // pred_check
              _
            $region34: #{tpu_custom_call.1} parent=27 // pred_check_branch
              %195 = sbr.rel target = $region36
            $region35: #{tpu_custom_call.1} parent=27 // pred_region
              %s197 = ssub.s32 256, 1
              loop: start=0, step=1, limit=1
              $region37: #{tpu_custom_call.1} parent=35 // loop_pre_header
                _
              $region38: #{tpu_custom_call.1} parent=35 // loop_header
                %s199 = sphi 0, %s203
                %p200 = scmp.ge.s32.totalorder %s199, 1
                %s204 = sphi %s189, %s189
                %s205 = sphi %s187, %s187
              $region39: #{tpu_custom_call.1} parent=35 // loop_header_branch
                %202 = sbr.rel (%p200) target = $region43
              $region40: #{tpu_custom_call.1} parent=35 // loop_body
                %v206 = vld [vmem:[%s204] sm:%s197]
                %207 = vst [vmem:[%s205] sm:%s197] %v206
                %v208 = vld [vmem:[%s204 + $0x10] sm:%s197]
                %209 = vst [vmem:[%s205 + $0x8] sm:%s197] %v208
                %v210 = vld [vmem:[%s204 + $0x20] sm:%s197]
                %211 = vst [vmem:[%s205 + $0x10] sm:%s197] %v210
                %v212 = vld [vmem:[%s204 + $0x30] sm:%s197]
                %213 = vst [vmem:[%s205 + $0x18] sm:%s197] %v212
                %v214 = vld [vmem:[%s204 + $0x40] sm:%s197]
                %215 = vst [vmem:[%s205 + $0x20] sm:%s197] %v214
                %v216 = vld [vmem:[%s204 + $0x50] sm:%s197]
                %217 = vst [vmem:[%s205 + $0x28] sm:%s197] %v216
                %v218 = vld [vmem:[%s204 + $0x60] sm:%s197]
                %219 = vst [vmem:[%s205 + $0x30] sm:%s197] %v218
                %v220 = vld [vmem:[%s204 + $0x70] sm:%s197]
                %221 = vst [vmem:[%s205 + $0x38] sm:%s197] %v220
              $region41: #{tpu_custom_call.1} parent=35 // loop_footer
                %s203 = sadd.s32 1, %s199
              $region42: #{tpu_custom_call.1} parent=35 // loop_footer_branch
                %198 = sbr.rel target = $region38
              $region43: #{tpu_custom_call.1} parent=35 // loop_exit
                _
            $region36: #{tpu_custom_call.1} parent=27 // pred_fallthru
              _
          $region28: #{tpu_custom_call.1} parent=23 // pred_fallthru
            _
          %250 = vnop
        $region24: #{tpu_custom_call.1} parent=19 // pred_fallthru
          _
        // Predicated region
        $region59: #{tpu_custom_call.1} parent=19 // pred_check
          %p251 = pneg %p95
        $region60: #{tpu_custom_call.1} parent=19 // pred_check_branch
          %253 = sbr.rel (%p251) target = $region62
        $region61: #{tpu_custom_call.1} parent=19 // pred_region
          %s254 = sand.u32 %s85, 1
          %s255 = sand.u32 %s85, 1
          %s256 = smul.addr %s255, 64
          %s257 = scalar_lea.vmem [#allocation4], %s256
          %s258 = smul.addr %s19, 8
          %s259 = scalar_lea.vmem %s2, %s258
          // Predicated region
          $region63: #{tpu_custom_call.1} parent=61 // pred_check
            _
          $region64: #{tpu_custom_call.1} parent=61 // pred_check_branch
            %261 = sbr.rel (0) target = $region66
          $region65: #{tpu_custom_call.1} parent=61 // pred_region
            // Predicated region
            $region67: #{tpu_custom_call.1} parent=65 // pred_check
              _
            $region68: #{tpu_custom_call.1} parent=65 // pred_check_branch
              %263 = sbr.rel (0) target = $region70
            $region69: #{tpu_custom_call.1} parent=65 // pred_region
              // Predicated region
              $region82: #{tpu_custom_call.1} parent=69 // pred_check
                _
              $region83: #{tpu_custom_call.1} parent=69 // pred_check_branch
                %293 = sbr.rel (0) target = $region85
              $region84: #{tpu_custom_call.1} parent=69 // pred_region
                loop: start=0, step=1, limit=1
                $region86: #{tpu_custom_call.1} parent=84 // loop_pre_header
                  _
                $region87: #{tpu_custom_call.1} parent=84 // loop_header
                  %s295 = sphi 0, %s299
                  %p296 = scmp.ge.s32.totalorder %s295, 1
                  %s300 = sphi %s259, %s259
                  %s301 = sphi %s257, %s257
                $region88: #{tpu_custom_call.1} parent=84 // loop_header_branch
                  %298 = sbr.rel (%p296) target = $region92
                $region89: #{tpu_custom_call.1} parent=84 // loop_body
                  %v302 = vld [vmem:[%s300] sm:$0xff]
                  %303 = vst [vmem:[%s301] sm:$0xff] %v302
                  %v304 = vld [vmem:[%s300 + $0x10] sm:$0xff]
                  %305 = vst [vmem:[%s301 + $0x8] sm:$0xff] %v304
                  %v306 = vld [vmem:[%s300 + $0x20] sm:$0xff]
                  %307 = vst [vmem:[%s301 + $0x10] sm:$0xff] %v306
                  %v308 = vld [vmem:[%s300 + $0x30] sm:$0xff]
                  %309 = vst [vmem:[%s301 + $0x18] sm:$0xff] %v308
                  %v310 = vld [vmem:[%s300 + $0x40] sm:$0xff]
                  %311 = vst [vmem:[%s301 + $0x20] sm:$0xff] %v310
                  %v312 = vld [vmem:[%s300 + $0x50] sm:$0xff]
                  %313 = vst [vmem:[%s301 + $0x28] sm:$0xff] %v312
                  %v314 = vld [vmem:[%s300 + $0x60] sm:$0xff]
                  %315 = vst [vmem:[%s301 + $0x30] sm:$0xff] %v314
                  %v316 = vld [vmem:[%s300 + $0x70] sm:$0xff]
                  %317 = vst [vmem:[%s301 + $0x38] sm:$0xff] %v316
                $region90: #{tpu_custom_call.1} parent=84 // loop_footer
                  %s299 = sadd.s32 1, %s295
                $region91: #{tpu_custom_call.1} parent=84 // loop_footer_branch
                  %294 = sbr.rel target = $region87
                $region92: #{tpu_custom_call.1} parent=84 // loop_exit
                  _
              $region85: #{tpu_custom_call.1} parent=69 // pred_fallthru
                _
              // Predicated region
              $region93: #{tpu_custom_call.1} parent=69 // pred_check
                _
              $region94: #{tpu_custom_call.1} parent=69 // pred_check_branch
                %319 = sbr.rel target = $region96
              $region95: #{tpu_custom_call.1} parent=69 // pred_region
                _
              $region96: #{tpu_custom_call.1} parent=69 // pred_fallthru
                _
            $region70: #{tpu_custom_call.1} parent=65 // pred_fallthru
              _
            // Predicated region
            $region71: #{tpu_custom_call.1} parent=65 // pred_check
              _
            $region72: #{tpu_custom_call.1} parent=65 // pred_check_branch
              %265 = sbr.rel target = $region74
            $region73: #{tpu_custom_call.1} parent=65 // pred_region
              %s267 = ssub.s32 256, 1
              loop: start=0, step=1, limit=1
              $region75: #{tpu_custom_call.1} parent=73 // loop_pre_header
                _
              $region76: #{tpu_custom_call.1} parent=73 // loop_header
                %s269 = sphi 0, %s273
                %p270 = scmp.ge.s32.totalorder %s269, 1
                %s274 = sphi %s259, %s259
                %s275 = sphi %s257, %s257
              $region77: #{tpu_custom_call.1} parent=73 // loop_header_branch
                %272 = sbr.rel (%p270) target = $region81
              $region78: #{tpu_custom_call.1} parent=73 // loop_body
                %v276 = vld [vmem:[%s274] sm:%s267]
                %277 = vst [vmem:[%s275] sm:%s267] %v276
                %v278 = vld [vmem:[%s274 + $0x10] sm:%s267]
                %279 = vst [vmem:[%s275 + $0x8] sm:%s267] %v278
                %v280 = vld [vmem:[%s274 + $0x20] sm:%s267]
                %281 = vst [vmem:[%s275 + $0x10] sm:%s267] %v280
                %v282 = vld [vmem:[%s274 + $0x30] sm:%s267]
                %283 = vst [vmem:[%s275 + $0x18] sm:%s267] %v282
                %v284 = vld [vmem:[%s274 + $0x40] sm:%s267]
                %285 = vst [vmem:[%s275 + $0x20] sm:%s267] %v284
                %v286 = vld [vmem:[%s274 + $0x50] sm:%s267]
                %287 = vst [vmem:[%s275 + $0x28] sm:%s267] %v286
                %v288 = vld [vmem:[%s274 + $0x60] sm:%s267]
                %289 = vst [vmem:[%s275 + $0x30] sm:%s267] %v288
                %v290 = vld [vmem:[%s274 + $0x70] sm:%s267]
                %291 = vst [vmem:[%s275 + $0x38] sm:%s267] %v290
              $region79: #{tpu_custom_call.1} parent=73 // loop_footer
                %s273 = sadd.s32 1, %s269
              $region80: #{tpu_custom_call.1} parent=73 // loop_footer_branch
                %268 = sbr.rel target = $region76
              $region81: #{tpu_custom_call.1} parent=73 // loop_exit
                _
            $region74: #{tpu_custom_call.1} parent=65 // pred_fallthru
              _
          $region66: #{tpu_custom_call.1} parent=61 // pred_fallthru
            _
          %320 = vnop
        $region62: #{tpu_custom_call.1} parent=19 // pred_fallthru
          _
        // Predicated region
        $region97: #{tpu_custom_call.1} parent=19 // pred_check
          %p321 = pneg %p121
        $region98: #{tpu_custom_call.1} parent=19 // pred_check_branch
          %323 = sbr.rel (%p321) target = $region100
        $region99: #{tpu_custom_call.1} parent=19 // pred_region
          %s324 = smul.u32 16, %s19
          %p325 = scmp.lt.s32.totalorder %s324, 31
          %s326 = scalar_select %p325, %s324, 31
          %s327 = smul.addr %s326, 8
          %s328 = scalar_lea.vmem %s3, %s327
          %s329 = smul.u32 16, %s19
        $region100: #{tpu_custom_call.1} parent=19 // pred_fallthru
          _
      $region20: #{tpu_custom_call.1} parent=5 // pred_fallthru
        _
      %p330 = scmp.le.s32.totalorder 1, %s11
      %p331 = scmp.lt.s32.totalorder %s11, 3
      %p332 = pnand %p330, %p331
      %p333 = pneg %p332
      // Predicated region
      $region101: #{tpu_custom_call.1} parent=5 // pred_check
        _
      $region102: #{tpu_custom_call.1} parent=5 // pred_check_branch
        %335 = sbr.rel (%p332) target = $region104
      $region103: #{tpu_custom_call.1} parent=5 // pred_region
        %s336 = ssub.s32 %s11, 1
        %s337 = sand.u32 %s62, 1
        %s338 = sand.u32 %s62, 1
        %s339 = smul.addr %s338, 64
        %s340 = scalar_lea.vmem [#allocation3], %s339
        // Predicated region
        $region105: #{tpu_custom_call.1} parent=103 // pred_check
          %p341 = pneg %p75
        $region106: #{tpu_custom_call.1} parent=103 // pred_check_branch
          %343 = sbr.rel (%p341) target = $region108
        $region107: #{tpu_custom_call.1} parent=103 // pred_region
          _
        $region108: #{tpu_custom_call.1} parent=103 // pred_fallthru
          _
        %s344 = sand.u32 %s88, 1
        %s345 = sand.u32 %s88, 1
        %s346 = smul.addr %s345, 64
        %s347 = scalar_lea.vmem [#allocation4], %s346
        // Predicated region
        $region109: #{tpu_custom_call.1} parent=103 // pred_check
          %p348 = pneg %p101
        $region110: #{tpu_custom_call.1} parent=103 // pred_check_branch
          %350 = sbr.rel (%p348) target = $region112
        $region111: #{tpu_custom_call.1} parent=103 // pred_region
          _
        $region112: #{tpu_custom_call.1} parent=103 // pred_fallthru
          _
        %s351 = smul.u32 2, %s20
        %p352 = scmp.lt.s32.totalorder %s351, 1
        %s353 = scalar_select %p352, %s351, 1
        %s354 = smul.addr %s353, 8
        %s355 = scalar_lea.vmem %s0, %s354
        %p356 = pneg %p49
        %p357 = pneg %p46
        %s358 = sand.u32 %s62, 1
        %s359 = sand.u32 %s62, 1
        %s360 = smul.addr %s359, 64
        %s361 = scalar_lea.vmem [#allocation3], %s360
        %p362 = pneg %p75
        %p363 = pneg %p72
        %s364 = sand.u32 %s88, 1
        %s365 = sand.u32 %s88, 1
        %s366 = smul.addr %s365, 64
        %s367 = scalar_lea.vmem [#allocation4], %s366
        %p368 = pneg %p101
        %p369 = pneg %p98
        %s370 = smul.u32 16, %s21
        %p371 = scmp.lt.s32.totalorder %s370, 31
        %s372 = scalar_select %p371, %s370, 31
        %s373 = smul.addr %s372, 8
        %s374 = scalar_lea.vmem %s3, %s373
        %p375 = pneg %p127
        %p376 = pneg %p124
        %p377 = pneg %p153
        %p378 = pneg %p150
        %s379 = smul.u32 2, %s20
        %p380 = scmp.lt.s32.totalorder %s379, 1
        %s381 = scalar_select %p380, %s379, 1
        %s382 = smul.addr %s381, 8
        %s383 = scalar_lea.vmem %s0, %s382
        %s384 = smul.u32 2, %s20
        %s385 = smul.u32 16, %s21
        %p386 = scmp.lt.s32.totalorder %s385, 31
        %s387 = scalar_select %p386, %s385, 31
        %s388 = smul.addr %s387, 8
        %s389 = scalar_lea.vmem %s3, %s388
        %s390 = smul.u32 16, %s21
        %s391 = smul.u32 2, %s20
        %v392 = vld [vmem:[%s383] sm:$0xff]
        %v393 = vld [vmem:[%s383 + $0x8] sm:$0xff]
        %v394 = vld [vmem:[%s340] sm:$0xff]
        %v395 = vld [vmem:[%s340 + $0x8] sm:$0xff]
        %v396 = vld [vmem:[%s340 + $0x10] sm:$0xff]
        %v397 = vld [vmem:[%s340 + $0x18] sm:$0xff]
        %v398 = vld [vmem:[%s340 + $0x20] sm:$0xff]
        %v399 = vld [vmem:[%s340 + $0x28] sm:$0xff]
        %v400 = vld [vmem:[%s340 + $0x30] sm:$0xff]
        %v401 = vld [vmem:[%s340 + $0x38] sm:$0xff]
        %vm402 = vcmask 523264
        %v404 = vsel %vm402, %v392, 0
        %v407 = vsel %vm402, %v393, 0
        %409 = vmatpush.msra.mxu0 0.0
        %410 = vmatpush.msra.mxu0 0.0
        %411 = vmatpush.msra.mxu0 0.0
        %412 = vmatpush.msra.mxu0 0.0
        %413 = vmatpush.msra.mxu0 0.0
        %414 = vmatpush.msra.mxu0 0.0
        %415 = vmatpush.msra.mxu0 0.0
        %416 = vmatpush.msra.mxu0 0.0
        %417 = vmatpush.msra.mxu0 %v401
        %418 = vmatpush.msra.mxu0 %v400
        %419 = vmatpush.msra.mxu0 %v399
        %420 = vmatpush.msra.mxu0 %v398
        %421 = vmatpush.msra.mxu0 %v397
        %422 = vmatpush.msra.mxu0 %v396
        %423 = vmatpush.msra.mxu0 %v395
        %424 = vmatpush.msra.mxu0 %v394
        %425 = vmatmul.f32.gmra.mxu0 %v404
        %v426 = vpop.f32.mrf.mxu0
        %v427 = vadd.f32 0.0, %v426
        %428 = vmatmul.f32.gmra.mxu0 %v407
        %v429 = vpop.f32.mrf.mxu0
        %v430 = vadd.f32 0.0, %v429
        %431 = vdwg.mxu0
        %v432 = vld [vmem:[%s347] sm:$0xff]
        %v433 = vld [vmem:[%s347 + $0x8] sm:$0xff]
        %v434 = vld [vmem:[%s347 + $0x10] sm:$0xff]
        %v435 = vld [vmem:[%s347 + $0x18] sm:$0xff]
        %v436 = vld [vmem:[%s347 + $0x20] sm:$0xff]
        %v437 = vld [vmem:[%s347 + $0x28] sm:$0xff]
        %v438 = vld [vmem:[%s347 + $0x30] sm:$0xff]
        %v439 = vld [vmem:[%s347 + $0x38] sm:$0xff]
        %440 = vmatpush.msra.mxu0 0.0
        %441 = vmatpush.msra.mxu0 0.0
        %442 = vmatpush.msra.mxu0 0.0
        %443 = vmatpush.msra.mxu0 0.0
        %444 = vmatpush.msra.mxu0 0.0
        %445 = vmatpush.msra.mxu0 0.0
        %446 = vmatpush.msra.mxu0 0.0
        %447 = vmatpush.msra.mxu0 0.0
        %448 = vmatpush.msra.mxu0 %v439
        %449 = vmatpush.msra.mxu0 %v438
        %450 = vmatpush.msra.mxu0 %v437
        %451 = vmatpush.msra.mxu0 %v436
        %452 = vmatpush.msra.mxu0 %v435
        %453 = vmatpush.msra.mxu0 %v434
        %454 = vmatpush.msra.mxu0 %v433
        %455 = vmatpush.msra.mxu0 %v432
        %456 = vmatmul.f32.gmra.mxu0 %v404
        %v457 = vpop.f32.mrf.mxu0
        %v458 = vadd.f32 0.0, %v457
        %459 = vmatmul.f32.gmra.mxu0 %v407
        %v460 = vpop.f32.mrf.mxu0
        %v461 = vadd.f32 0.0, %v460
        %462 = vdwg.mxu0
        %v463 = vxor.u32 %v427, 2147483648
        %v464 = vxor.u32 %v430, 2147483648
        %v465 = vmul.f32 %v463, 1.442695
        %v466 = vpow.pop %v465
        %v467 = vmul.f32 %v464, 1.442695
        %v468 = vpow.pop %v467
        %v469 = vadd.f32 %v466, 1.0
        %v470 = vadd.f32 %v468, 1.0
        %v471 = vrcp.pop %v469
        %v472 = vmul.f32 %v469, %v471
        %v473 = vsub.f32 1.0, %v472
        %v474 = vmul.f32 %v471, %v473
        %v475 = vadd.f32 %v471, %v474
        %vm476 = vweird.f32 %v469
        %vm477 = vweird.f32 %v471
        %vm478 = vmor %vm476, %vm477
        %v479 = vsel %vm478, %v471, %v475
        %v480 = vand.u32 2147483647, %v469
        %vm481 = vcmp.eq.f32.partialorder %v480, 8.507059e+37
        %v482 = vand.u32 %v469, 2147483648
        %v483 = vor.u32 1.1754944e-38, %v482
        %v484 = vsel %vm481, %v483, %v479
        %v485 = vmul.f32 1.0, %v484
        %v486 = vrcp.pop %v470
        %v487 = vmul.f32 %v470, %v486
        %v488 = vsub.f32 1.0, %v487
        %v489 = vmul.f32 %v486, %v488
        %v490 = vadd.f32 %v486, %v489
        %vm491 = vweird.f32 %v470
        %vm492 = vweird.f32 %v486
        %vm493 = vmor %vm491, %vm492
        %v494 = vsel %vm493, %v486, %v490
        %v495 = vand.u32 2147483647, %v470
        %vm496 = vcmp.eq.f32.partialorder %v495, 8.507059e+37
        %v497 = vand.u32 %v470, 2147483648
        %v498 = vor.u32 1.1754944e-38, %v497
        %v499 = vsel %vm496, %v498, %v494
        %v500 = vmul.f32 1.0, %v499
        %v501 = vmul.f32 %v427, %v485
        %v502 = vmul.f32 %v430, %v500
        %v503 = vmul.f32 %v501, %v458
        %v504 = vmul.f32 %v502, %v461
        %v505 = vld [vmem:[%s389] sm:$0xff]
        %v506 = vld [vmem:[%s389 + $0x8] sm:$0xff]
        %v507 = vld [vmem:[%s389 + $0x10] sm:$0xff]
        %v508 = vld [vmem:[%s389 + $0x18] sm:$0xff]
        %v509 = vld [vmem:[%s389 + $0x20] sm:$0xff]
        %v510 = vld [vmem:[%s389 + $0x28] sm:$0xff]
        %v511 = vld [vmem:[%s389 + $0x30] sm:$0xff]
        %v512 = vld [vmem:[%s389 + $0x38] sm:$0xff]
        %v513 = vld [vmem:[%s389 + $0x40] sm:$0xff]
        %v514 = vld [vmem:[%s389 + $0x48] sm:$0xff]
        %v515 = vld [vmem:[%s389 + $0x50] sm:$0xff]
        %v516 = vld [vmem:[%s389 + $0x58] sm:$0xff]
        %v517 = vld [vmem:[%s389 + $0x60] sm:$0xff]
        %v518 = vld [vmem:[%s389 + $0x68] sm:$0xff]
        %v519 = vld [vmem:[%s389 + $0x70] sm:$0xff]
        %v520 = vld [vmem:[%s389 + $0x78] sm:$0xff]
        %521 = vmatpush.msra.mxu0 %v520
        %522 = vmatpush.msra.mxu0 %v519
        %523 = vmatpush.msra.mxu0 %v518
        %524 = vmatpush.msra.mxu0 %v517
        %525 = vmatpush.msra.mxu0 %v516
        %526 = vmatpush.msra.mxu0 %v515
        %527 = vmatpush.msra.mxu0 %v514
        %528 = vmatpush.msra.mxu0 %v513
        %529 = vmatpush.msra.mxu0 %v512
        %530 = vmatpush.msra.mxu0 %v511
        %531 = vmatpush.msra.mxu0 %v510
        %532 = vmatpush.msra.mxu0 %v509
        %533 = vmatpush.msra.mxu0 %v508
        %534 = vmatpush.msra.mxu0 %v507
        %535 = vmatpush.msra.mxu0 %v506
        %536 = vmatpush.msra.mxu0 %v505
        %537 = vmatmul.f32.gmra.mxu0 %v503
        %v538 = vpop.f32.mrf.mxu0
        %v539 = vadd.f32 0.0, %v538
        %540 = vmatmul.f32.gmra.mxu0 %v504
        %v541 = vpop.f32.mrf.mxu0
        %v542 = vadd.f32 0.0, %v541
        %543 = vdwg.mxu0
        %p544 = scmp.eq.s32.totalorder %s21, 0
        // Predicated region
        $region113: #{tpu_custom_call.1} parent=103 // pred_check
          %p545 = pneg %p544
        $region114: #{tpu_custom_call.1} parent=103 // pred_check_branch
          %547 = sbr.rel (%p545) target = $region116
        $region115: #{tpu_custom_call.1} parent=103 // pred_region
          %548 = vst.msk [vmem:[#allocation2] sm:$0xff] %vm402, %v539
          %549 = vst.msk [vmem:[#allocation2 + $0x8] sm:$0xff] %vm402, %v542
        $region116: #{tpu_custom_call.1} parent=103 // pred_fallthru
          _
        %p550 = scmp.ne.s32.totalorder %s21, 0
        // Predicated region
        $region117: #{tpu_custom_call.1} parent=103 // pred_check
          %p551 = pneg %p550
        $region118: #{tpu_custom_call.1} parent=103 // pred_check_branch
          %553 = sbr.rel (%p551) target = $region120
        $region119: #{tpu_custom_call.1} parent=103 // pred_region
          %v554 = vld [vmem:[#allocation2] sm:$0xff]
          %v555 = vld [vmem:[#allocation2 + $0x8] sm:$0xff]
          %v556 = vadd.f32 %v554, %v539
          %v557 = vadd.f32 %v555, %v542
          %558 = vst.msk [vmem:[#allocation2] sm:$0xff] %vm402, %v556
          %559 = vst.msk [vmem:[#allocation2 + $0x8] sm:$0xff] %vm402, %v557
        $region120: #{tpu_custom_call.1} parent=103 // pred_fallthru
          _
        %p560 = scmp.eq.s32.totalorder %s21, 1
        // Predicated region
        $region121: #{tpu_custom_call.1} parent=103 // pred_check
          %p561 = pneg %p560
        $region122: #{tpu_custom_call.1} parent=103 // pred_check_branch
          %563 = sbr.rel (%p561) target = $region124
        $region123: #{tpu_custom_call.1} parent=103 // pred_region
          %v564 = vld [vmem:[#allocation2] sm:$0xff]
          %v565 = vld [vmem:[#allocation2 + $0x8] sm:$0xff]
          %566 = vst.msk [vmem:[#allocation5] sm:$0xff] %vm402, %v564
          %567 = vst.msk [vmem:[#allocation5 + $0x8] sm:$0xff] %vm402, %v565
        $region124: #{tpu_custom_call.1} parent=103 // pred_fallthru
          _
        // Predicated region
        $region125: #{tpu_custom_call.1} parent=103 // pred_check
          %p568 = pneg %p150
        $region126: #{tpu_custom_call.1} parent=103 // pred_check_branch
          %570 = sbr.rel (%p568) target = $region128
        $region127: #{tpu_custom_call.1} parent=103 // pred_region
          %s571 = smul.u32 2, %s20
          %573 = vsyncadd [#allocation6], 0
          %s574 = smul.addr %s571, 8
          %s575 = scalar_lea.hbm %s4, %s574
          %s576 = sshll.u32 [#allocation5], 4
          %s577 = int_to_ptr.vmem [resolvable:$true] %s576
          %s578 = sshll.u32 %s575, 4
          %s579 = int_to_ptr.hbm [resolvable:$true] %s578
          %584 = dma.vmem_to_hbm [thread:$0]  %s577, 256, %s579, [#allocation6], 128, 128, 8
        $region128: #{tpu_custom_call.1} parent=103 // pred_fallthru
          _
        // Predicated region
        $region129: #{tpu_custom_call.1} parent=103 // pred_check
          %p585 = pneg %p150
        $region130: #{tpu_custom_call.1} parent=103 // pred_check_branch
          %587 = sbr.rel (%p585) target = $region132
        $region131: #{tpu_custom_call.1} parent=103 // pred_region
          %589 = dma.done [#allocation6], 256
        $region132: #{tpu_custom_call.1} parent=103 // pred_fallthru
          _
      $region104: #{tpu_custom_call.1} parent=5 // pred_fallthru
        _
      %p590 = scmp.le.s32.totalorder 2, %s11
      // Predicated region
      $region133: #{tpu_custom_call.1} parent=5 // pred_check
        %p591 = pneg %p590
      $region134: #{tpu_custom_call.1} parent=5 // pred_check_branch
        %593 = sbr.rel (%p591) target = $region136
      $region135: #{tpu_custom_call.1} parent=5 // pred_region
        %s594 = ssub.s32 %s11, 2
      $region136: #{tpu_custom_call.1} parent=5 // pred_fallthru
        _
    $region6: #{tpu_custom_call.1} parent=1 // loop_footer
      %s15 = sadd.s32 1, %s11
    $region7: #{tpu_custom_call.1} parent=1 // loop_footer_branch
      %10 = sbr.rel target = $region3
    $region8: #{tpu_custom_call.1} parent=1 // loop_exit
      _
    %595 = vsyncpa [#allocation6], 1
    %s596 = scalar_lea.sflag [#allocation6], 1
    %597 = vsyncpa %s596, 1

</llo_original>
